<compile_context>
chip_gen: v5e
topology: v5e:2x2
jax: 0.10.0
libtpu: 0.0.40
codegen_flags: <defaults>
</compile_context>

<pallas_src>
import math

import jax
import jax.numpy as jnp
import numpy as np
from jax.experimental import pallas as pl
from jax.experimental.pallas import tpu as pltpu


def _saits_embedding_kernel(x_ref, m_ref, wx_ref, wm_ref, posb_ref, o_ref):
    # x_ref:    [TILE_M, F]       rows of X           (TILE_M = tile_b * T)
    # m_ref:    [TILE_M, F]       rows of missing_mask
    # wx_ref:   [F, d_out]        top half of W.T   (acts on X)
    # wm_ref:   [F, d_out]        bottom half of W.T (acts on mask)
    # posb_ref: [TILE_M, d_out]   (pos_table[:T] + bias), tiled to TILE_M rows
    # o_ref:    [TILE_M, d_out]
    y = jnp.dot(x_ref[...], wx_ref[...], preferred_element_type=jnp.float32)
    y = y + jnp.dot(m_ref[...], wm_ref[...], preferred_element_type=jnp.float32)
    o_ref[...] = (y + posb_ref[...]).astype(o_ref.dtype)


def _saits_embedding_kernel_nomask(x_ref, w_ref, posb_ref, o_ref):
    # Variant used when missing_mask is None (d_in == F).
    y = jnp.dot(x_ref[...], w_ref[...], preferred_element_type=jnp.float32)
    o_ref[...] = (y + posb_ref[...]).astype(o_ref.dtype)


def _pick_tile_b(B, T, rows_target=512):
    """Rows per grid step = tile_b * T.  Must be a multiple of 8 (sublane
    tiling) or cover all rows (block == full array dim is always legal)."""
    tile_b = max(1, min(B, max(1, rows_target // T)))
    while tile_b < B and (tile_b * T) % 8 != 0:
        tile_b += 1
    return tile_b


def saits_embedding_forward(X, missing_mask, weight, bias, pos_table,
                            with_pos=True, rows_target=512):
    """X, missing_mask: [B, T, F] float32.
    weight: [d_out, d_in] (torch nn.Linear layout), bias: [d_out],
    pos_table: [n_max_steps, d_out]."""
    B, T, F = X.shape
    d_out, d_in = weight.shape

    tile_b = _pick_tile_b(B, T, rows_target)
    tile_m = tile_b * T
    n_rows = B * T
    grid = (pl.cdiv(B, tile_b),)

    # Bias folded into the (per-time-step) additive table, then tiled so each
    # TILE_M-row block sees the correct positional row (TILE_M % T == 0).
    if with_pos:
        pos_b = pos_table[:T, :].astype(jnp.float32) + bias[None, :]     # [T, d_out]
    else:
        pos_b = jnp.broadcast_to(bias[None, :], (T, d_out)).astype(jnp.float32)
    pos_tiled = jnp.tile(pos_b, (tile_b, 1))                             # [TILE_M, d_out]

    out_shape = jax.ShapeDtypeStruct((n_rows, d_out), X.dtype)
    row_spec_in = lambda last: pl.BlockSpec((tile_m, last), lambda m: (m, 0))
    const_spec = lambda shp: pl.BlockSpec(shp, lambda m: (0, 0))

    compiler_params = pltpu.CompilerParams(
        dimension_semantics=("parallel",),  # M-tile axis: shards across v7x TCs
        # VMEM footprint here is tiny (<1 MiB for typical d_out); raise
        # vmem_limit_bytes only if rows_target/d_out are pushed much higher.
    )

    if missing_mask is not None:
        assert d_in == 2 * F, "Linear d_in must equal 2*F when a mask is given"
        X2 = X.reshape(n_rows, F)                 # free collapse of leading dims
        M2 = missing_mask.reshape(n_rows, F)
        w_t = weight.T                            # [d_in, d_out]
        w_x = w_t[:F, :]                          # [F, d_out]
        w_m = w_t[F:, :]                          # [F, d_out]

        cost = pl.CostEstimate(
            flops=2 * n_rows * d_in * d_out,
            transcendentals=0,
            bytes_accessed=4 * (2 * n_rows * F + d_in * d_out
                                + tile_m * d_out + n_rows * d_out),
        )
        out2 = pl.pallas_call(
            _saits_embedding_kernel,
            out_shape=out_shape,
            grid=grid,
            in_specs=[
                row_spec_in(F),                   # X rows
                row_spec_in(F),                   # mask rows
                const_spec((F, d_out)),           # W_x (resident)
                const_spec((F, d_out)),           # W_m (resident)
                const_spec((tile_m, d_out)),      # pos+bias (resident)
            ],
            out_specs=pl.BlockSpec((tile_m, d_out), lambda m: (m, 0)),
            compiler_params=compiler_params,
            cost_estimate=cost,
        )(X2, M2, w_x, w_m, pos_tiled)
    else:
        assert d_in == F, "Linear d_in must equal F when no mask is given"
        X2 = X.reshape(n_rows, F)
        w_t = weight.T                            # [F, d_out]
        cost = pl.CostEstimate(
            flops=2 * n_rows * d_in * d_out,
            transcendentals=0,
            bytes_accessed=4 * (n_rows * F + d_in * d_out
                                + tile_m * d_out + n_rows * d_out),
        )
        out2 = pl.pallas_call(
            _saits_embedding_kernel_nomask,
            out_shape=out_shape,
            grid=grid,
            in_specs=[
                row_spec_in(F),
                const_spec((F, d_out)),
                const_spec((tile_m, d_out)),
            ],
            out_specs=pl.BlockSpec((tile_m, d_out), lambda m: (m, 0)),
            compiler_params=compiler_params,
            cost_estimate=cost,
        )(X2, w_t, pos_tiled)

    return out2.reshape(B, T, d_out)


def make_sinusoid_table(n_positions, d_hid):
    """Exact port of SAITS PositionalEncoding._get_sinusoid_encoding_table."""
    pos = np.arange(n_positions)[:, None].astype(np.float64)           # [P, 1]
    hid_j = np.arange(d_hid)[None, :]                                  # [1, d_hid]
    angle = pos / np.power(10000.0, 2.0 * (hid_j // 2) / d_hid)        # [P, d_hid]
    table = np.zeros_like(angle)
    table[:, 0::2] = np.sin(angle[:, 0::2])
    table[:, 1::2] = np.cos(angle[:, 1::2])
    return jnp.asarray(table, dtype=jnp.float32)


if __name__ == "__main__":
    # Small shapes consistent with the module: batch=2, seq=8, features=4,
    # d_in = 2*features (X concat missing_mask) = 8, d_out = 32.
    B, T, F = 2, 8, 4
    d_in, d_out = 2 * F, 32
    n_max_steps = 1000

    key = jax.random.PRNGKey(0)
    kx, km, kw, kb = jax.random.split(key, 4)

    X = jax.random.normal(kx, (B, T, F), dtype=jnp.float32)
    missing_mask = (jax.random.uniform(km, (B, T, F)) > 0.3).astype(jnp.float32)

    # torch nn.Linear shapes: weight [d_out, d_in], bias [d_out].
    bound = 1.0 / math.sqrt(d_in)
    weight = jax.random.uniform(kw, (d_out, d_in), minval=-bound, maxval=bound,
                                dtype=jnp.float32)
    bias = jax.random.uniform(kb, (d_out,), minval=-bound, maxval=bound,
                              dtype=jnp.float32)

    pos_table = make_sinusoid_table(n_max_steps, d_out)

    out = saits_embedding_forward(X, missing_mask, weight, bias, pos_table,
                                  with_pos=True)
    out = jax.block_until_ready(out)

    # Pure-JAX reference check (matches the PyTorch forward).
    ref = (jnp.concatenate([X, missing_mask], axis=2) @ weight.T
           + bias + pos_table[:T][None])
    assert out.shape == (B, T, d_out)
    np.testing.assert_allclose(np.asarray(out), np.asarray(ref),
                               rtol=1e-5, atol=1e-5)

    # Also exercise the with_pos=False path (bias-only add table).
    out_np = saits_embedding_forward(X, missing_mask, weight, bias, pos_table,
                                     with_pos=False)
    out_np = jax.block_until_ready(out_np)
    ref_np = jnp.concatenate([X, missing_mask], axis=2) @ weight.T + bias
    np.testing.assert_allclose(np.asarray(out_np), np.asarray(ref_np),
                               rtol=1e-5, atol=1e-5)

    print("KERNEL_OK")
</pallas_src>

<mosaic_0001>
module attributes {stable_mosaic.version = 11 : i64} {
  func.func @_saits_embedding_kernel(%arg0: i32, %arg1: memref<16x4xf32, #tpu.memory_space<vmem>>, %arg2: memref<16x4xf32, #tpu.memory_space<vmem>>, %arg3: memref<4x32xf32, #tpu.memory_space<vmem>>, %arg4: memref<4x32xf32, #tpu.memory_space<vmem>>, %arg5: memref<16x32xf32, #tpu.memory_space<vmem>>, %arg6: memref<16x32xf32, #tpu.memory_space<vmem>>) attributes {dimension_semantics = [#tpu.dimension_semantics<parallel>], iteration_bounds = array<i64: 1>, scalar_prefetch = 0 : i64, scratch_operands = 0 : i64, tpu.core_type = #tpu.core_type<tc>, window_params = [{transform_indices = @transform_0, window_bounds = array<i64: 16, 4>}, {transform_indices = @transform_1, window_bounds = array<i64: 16, 4>}, {pipeline_mode = #tpu.pipeline_mode<synchronous>, transform_indices = @transform_2, window_bounds = array<i64: 4, 32>}, {pipeline_mode = #tpu.pipeline_mode<synchronous>, transform_indices = @transform_3, window_bounds = array<i64: 4, 32>}, {pipeline_mode = #tpu.pipeline_mode<synchronous>, transform_indices = @transform_4, window_bounds = array<i64: 16, 32>}, {transform_indices = @transform_5, window_bounds = array<i64: 16, 32>}]} {
    %c0 = arith.constant 0 : index
    %c0_0 = arith.constant 0 : index
    %0 = vector.load %arg1[%c0, %c0_0] : memref<16x4xf32, #tpu.memory_space<vmem>>, vector<16x4xf32>
    %c0_1 = arith.constant 0 : index
    %c0_2 = arith.constant 0 : index
    %1 = vector.load %arg3[%c0_1, %c0_2] : memref<4x32xf32, #tpu.memory_space<vmem>>, vector<4x32xf32>
    %cst = arith.constant dense<0.000000e+00> : vector<16x32xf32>
    %2 = tpu.matmul %0, %1, %cst {dimension_numbers = #tpu.dot_dimension_numbers<[1], [0], [0], [1], [0, 0, 1, 1], [], []>} : vector<16x4xf32>, vector<4x32xf32>, vector<16x32xf32> -> vector<16x32xf32>
    %c0_3 = arith.constant 0 : index
    %c0_4 = arith.constant 0 : index
    %3 = vector.load %arg2[%c0_3, %c0_4] : memref<16x4xf32, #tpu.memory_space<vmem>>, vector<16x4xf32>
    %c0_5 = arith.constant 0 : index
    %c0_6 = arith.constant 0 : index
    %4 = vector.load %arg4[%c0_5, %c0_6] : memref<4x32xf32, #tpu.memory_space<vmem>>, vector<4x32xf32>
    %cst_7 = arith.constant dense<0.000000e+00> : vector<16x32xf32>
    %5 = tpu.matmul %3, %4, %cst_7 {dimension_numbers = #tpu.dot_dimension_numbers<[1], [0], [0], [1], [0, 0, 1, 1], [], []>} : vector<16x4xf32>, vector<4x32xf32>, vector<16x32xf32> -> vector<16x32xf32>
    %6 = arith.addf %2, %5 : vector<16x32xf32>
    %c0_8 = arith.constant 0 : index
    %c0_9 = arith.constant 0 : index
    %7 = vector.load %arg5[%c0_8, %c0_9] : memref<16x32xf32, #tpu.memory_space<vmem>>, vector<16x32xf32>
    %8 = arith.addf %6, %7 : vector<16x32xf32>
    %c0_10 = arith.constant 0 : index
    %c0_11 = arith.constant 0 : index
    %9 = vector.load %arg6[%c0_10, %c0_11] : memref<16x32xf32, #tpu.memory_space<vmem>>, vector<16x32xf32>
    tpu.vector_store %arg6[%c0_10, %c0_11], %8 {strides = array<i32>} : memref<16x32xf32, #tpu.memory_space<vmem>>, vector<16x32xf32>,
    return
  }
  func.func @transform_0(%arg0: i32) -> (i32, i32) {
    %c0_i32 = arith.constant 0 : i32
    %c0_i32_0 = arith.constant 0 : i32
    return %arg0, %c0_i32 : i32, i32
  }
  func.func @transform_1(%arg0: i32) -> (i32, i32) {
    %c0_i32 = arith.constant 0 : i32
    %c0_i32_0 = arith.constant 0 : i32
    return %arg0, %c0_i32 : i32, i32
  }
  func.func @transform_2(%arg0: i32) -> (i32, i32) {
    %c0_i32 = arith.constant 0 : i32
    %c0_i32_0 = arith.constant 0 : i32
    %c0_i32_1 = arith.constant 0 : i32
    return %c0_i32, %c0_i32_0 : i32, i32
  }
  func.func @transform_3(%arg0: i32) -> (i32, i32) {
    %c0_i32 = arith.constant 0 : i32
    %c0_i32_0 = arith.constant 0 : i32
    %c0_i32_1 = arith.constant 0 : i32
    return %c0_i32, %c0_i32_0 : i32, i32
  }
  func.func @transform_4(%arg0: i32) -> (i32, i32) {
    %c0_i32 = arith.constant 0 : i32
    %c0_i32_0 = arith.constant 0 : i32
    %c0_i32_1 = arith.constant 0 : i32
    return %c0_i32, %c0_i32_0 : i32, i32
  }
  func.func @transform_5(%arg0: i32) -> (i32, i32) {
    %c0_i32 = arith.constant 0 : i32
    %c0_i32_0 = arith.constant 0 : i32
    return %arg0, %c0_i32 : i32, i32
  }
}

</mosaic_0001>

<llo_original>
// kernel: tpu_custom_call.1
$region0: #{tpu_custom_call.1}
  #allocation0 [shape = 'u32[]', space=smem, size = 0x4, offset = 0x4, fixed_abs, tag = 'smem constant byte address 0x4 - core index']
  #allocation1 [shape = 'u32[72,128]{1,0:T(1,128)}', space=vmem, size = 0x9000, scoped, tag = 'internal scratch']
  %s0 = inlined_call_operand.vmem [shape: f32[16,4], index: 0, kind: input, shape index: {}]
  %s1 = inlined_call_operand.vmem [shape: f32[16,4], index: 1, kind: input, shape index: {}]
  %s2 = inlined_call_operand.vmem [shape: f32[4,32], index: 2, kind: input, shape index: {}]
  %s3 = inlined_call_operand.vmem [shape: f32[4,32], index: 3, kind: input, shape index: {}]
  %s4 = inlined_call_operand.vmem [shape: f32[16,32], index: 4, kind: input, shape index: {}]
  %s5 = inlined_call_operand.hbm [shape: f32[16,32], index: 5, kind: output, shape index: {}]
  %s6 = sld [smem:[#allocation0]]
  $region30: #{tpu_custom_call.1} parent=0
    _
  %s8 = ssub.s32 1, %s6
  %s9 = scalar_select 0, %s8, %s6
  $region1: #{tpu_custom_call.1} parent=0
    #allocation2 [shape = 'u8[8192]{0}', space=vmem, size = 0x2000, scoped, tag = 'output window, operand 0, single buffered']
    #allocation3 [shape = 's32[1]{0}', space=sflag, size = 0x4, scoped, tag = 'scoped memory for tpu_custom_call.1']
    %10 = vsyncpa [#allocation3], 0
    // Predicated region
    $region2: #{tpu_custom_call.1} parent=1 // pred_check
      _
    $region3: #{tpu_custom_call.1} parent=1 // pred_check_branch
      %12 = sbr.rel (0) target = $region5
    $region4: #{tpu_custom_call.1} parent=1 // pred_region
      _
    $region5: #{tpu_custom_call.1} parent=1 // pred_fallthru
      _
    // Predicated region
    $region6: #{tpu_custom_call.1} parent=1 // pred_check
      _
    $region7: #{tpu_custom_call.1} parent=1 // pred_check_branch
      %14 = sbr.rel (0) target = $region9
    $region8: #{tpu_custom_call.1} parent=1 // pred_region
      _
    $region9: #{tpu_custom_call.1} parent=1 // pred_fallthru
      _
    // Predicated region
    $region10: #{tpu_custom_call.1} parent=1 // pred_check
      _
    $region11: #{tpu_custom_call.1} parent=1 // pred_check_branch
      %16 = sbr.rel (0) target = $region13
    $region12: #{tpu_custom_call.1} parent=1 // pred_region
      _
    $region13: #{tpu_custom_call.1} parent=1 // pred_fallthru
      _
    // Predicated region
    $region14: #{tpu_custom_call.1} parent=1 // pred_check
      _
    $region15: #{tpu_custom_call.1} parent=1 // pred_check_branch
      %18 = sbr.rel (0) target = $region17
    $region16: #{tpu_custom_call.1} parent=1 // pred_region
      _
    $region17: #{tpu_custom_call.1} parent=1 // pred_fallthru
      _
    // Predicated region
    $region18: #{tpu_custom_call.1} parent=1 // pred_check
      _
    $region19: #{tpu_custom_call.1} parent=1 // pred_check_branch
      %20 = sbr.rel (0) target = $region21
    $region20: #{tpu_custom_call.1} parent=1 // pred_region
      _
    $region21: #{tpu_custom_call.1} parent=1 // pred_fallthru
      _
    %v21 = vld [vmem:[%s0] sm:$0xff]
    %v22 = vld [vmem:[%s0 + $0x8] sm:$0xff]
    %v23 = vld [vmem:[%s2] sm:$0xf]
    %v24 = vld [vmem:[%s1] sm:$0xff]
    %v25 = vld [vmem:[%s1 + $0x8] sm:$0xff]
    %v26 = vld [vmem:[%s3] sm:$0xf]
    %vm27 = vcmask 31744
    %v29 = vsel %vm27, %v24, 0
    %v32 = vsel %vm27, %v25, 0
    %vm34 = vcmask 1043456
    %v36 = vsel %vm34, %v26, 0
    %38 = vmatpush.msra.mxu0 0.0
    %39 = vmatpush.msra.mxu0 0.0
    %40 = vmatpush.msra.mxu0 0.0
    %41 = vmatpush.msra.mxu0 0.0
    %42 = vmatpush.msra.mxu0 0.0
    %43 = vmatpush.msra.mxu0 0.0
    %44 = vmatpush.msra.mxu0 0.0
    %45 = vmatpush.msra.mxu0 0.0
    %46 = vmatpush.msra.mxu0 0.0
    %47 = vmatpush.msra.mxu0 0.0
    %48 = vmatpush.msra.mxu0 0.0
    %49 = vmatpush.msra.mxu0 0.0
    %50 = vmatpush.msra.mxu0 0.0
    %51 = vmatpush.msra.mxu0 0.0
    %52 = vmatpush.msra.mxu0 0.0
    %53 = vmatpush.msra.mxu0 %v36
    %54 = vmatmul.f32.gmra.mxu0 %v29
    %v55 = vpop.f32.mrf.mxu0
    %v56 = vadd.f32 0.0, %v55
    %57 = vmatmul.f32.gmra.mxu0 %v32
    %v58 = vpop.f32.mrf.mxu0
    %v59 = vadd.f32 0.0, %v58
    %60 = vdwg.mxu0
    %v62 = vsel %vm27, %v21, 0
    %v65 = vsel %vm27, %v22, 0
    %v68 = vsel %vm34, %v23, 0
    %70 = vmatpush.msra.mxu0 0.0
    %71 = vmatpush.msra.mxu0 0.0
    %72 = vmatpush.msra.mxu0 0.0
    %73 = vmatpush.msra.mxu0 0.0
    %74 = vmatpush.msra.mxu0 0.0
    %75 = vmatpush.msra.mxu0 0.0
    %76 = vmatpush.msra.mxu0 0.0
    %77 = vmatpush.msra.mxu0 0.0
    %78 = vmatpush.msra.mxu0 0.0
    %79 = vmatpush.msra.mxu0 0.0
    %80 = vmatpush.msra.mxu0 0.0
    %81 = vmatpush.msra.mxu0 0.0
    %82 = vmatpush.msra.mxu0 0.0
    %83 = vmatpush.msra.mxu0 0.0
    %84 = vmatpush.msra.mxu0 0.0
    %85 = vmatpush.msra.mxu0 %v68
    %86 = vmatmul.f32.gmra.mxu0 %v62
    %v87 = vpop.f32.mrf.mxu0
    %v88 = vadd.f32 %v56, %v87
    %89 = vmatmul.f32.gmra.mxu0 %v65
    %v90 = vpop.f32.mrf.mxu0
    %v91 = vadd.f32 %v59, %v90
    %92 = vdwg.mxu0
    %v93 = vld [vmem:[%s4] sm:$0xff]
    %v94 = vld [vmem:[%s4 + $0x8] sm:$0xff]
    %v95 = vadd.f32 %v88, %v93
    %v96 = vadd.f32 %v91, %v94
    %vm97 = vcmask 261120
    %98 = vst.msk [vmem:[#allocation2] sm:$0xff] %vm97, %v95
    %99 = vst.msk [vmem:[#allocation2 + $0x8] sm:$0xff] %vm97, %v96
    // Predicated region
    $region22: #{tpu_custom_call.1} parent=1 // pred_check
      _
    $region23: #{tpu_custom_call.1} parent=1 // pred_check_branch
      %101 = sbr.rel (0) target = $region25
    $region24: #{tpu_custom_call.1} parent=1 // pred_region
      %103 = vsyncadd [#allocation3], 0
      %s104 = sshll.u32 [#allocation2], 4
      %s105 = int_to_ptr.vmem [resolvable:$true] %s104
      %s106 = sshll.u32 %s5, 4
      %s107 = int_to_ptr.hbm [resolvable:$true] %s106
      %112 = dma.vmem_to_hbm [thread:$0]  %s105, 256, %s107, [#allocation3], 128, 128, 8
    $region25: #{tpu_custom_call.1} parent=1 // pred_fallthru
      _
    // Predicated region
    $region26: #{tpu_custom_call.1} parent=1 // pred_check
      _
    $region27: #{tpu_custom_call.1} parent=1 // pred_check_branch
      %114 = sbr.rel (0) target = $region29
    $region28: #{tpu_custom_call.1} parent=1 // pred_region
      %116 = dma.done [#allocation3], 256
    $region29: #{tpu_custom_call.1} parent=1 // pred_fallthru
      _
    %117 = vsyncpa [#allocation3], 1

</llo_original>
